<compile_context>
chip_gen: v5e
topology: v5e:2x2
jax: 0.10.0
libtpu: 0.0.40
codegen_flags: <defaults>
</compile_context>

<pallas_src>
import numpy as np
import jax
import jax.numpy as jnp
from jax import lax
from jax.experimental import pallas as pl
from jax.experimental.pallas import tpu as pltpu


# ---------------------------------------------------------------------------
# Parameter glue (host-side, numpy)
# ---------------------------------------------------------------------------
def _grouped_1x1_to_dense(w, groups):
    """torch (Cout, Cin/groups, 1, 1) grouped 1x1 conv -> dense (Cin, Cout)."""
    w = np.asarray(w, np.float32)
    cout, cin_g = w.shape[0], w.shape[1]
    cin, cout_g = cin_g * groups, cout // groups
    dense = np.zeros((cin, cout), np.float32)
    for gi in range(groups):
        dense[gi * cin_g:(gi + 1) * cin_g, gi * cout_g:(gi + 1) * cout_g] = \
            w[gi * cout_g:(gi + 1) * cout_g, :, 0, 0].T
    return dense


def _bn_scale_shift(bn, eps=1e-5):
    scale = np.asarray(bn['gamma']) / np.sqrt(np.asarray(bn['var']) + eps)
    shift = np.asarray(bn['beta']) - np.asarray(bn['mean']) * scale
    return scale.astype(np.float32), shift.astype(np.float32)


def init_params(key, in_planes, out_planes, groups):
    mid = out_planes // 4
    g = 1 if in_planes == 24 else groups
    ks = jax.random.split(key, 16)
    p = {
        'w1': jax.random.normal(ks[0], (mid, in_planes // g, 1, 1), jnp.float32) * 0.1,
        'w2': jax.random.normal(ks[1], (mid, 1, 3, 3), jnp.float32) * 0.1,
        'w3': jax.random.normal(ks[2], (out_planes, mid // groups, 1, 1), jnp.float32) * 0.1,
    }
    for i, (name, c) in enumerate([('bn1', mid), ('bn2', mid), ('bn3', out_planes)]):
        k0, k1, k2, k3 = jax.random.split(ks[3 + i], 4)
        p[name] = dict(
            gamma=1.0 + 0.1 * jax.random.normal(k0, (c,), jnp.float32),
            beta=0.1 * jax.random.normal(k1, (c,), jnp.float32),
            mean=0.1 * jax.random.normal(k2, (c,), jnp.float32),
            var=jnp.abs(jax.random.normal(k3, (c,), jnp.float32)) * 0.5 + 0.5,
        )
    return p, g


# ---------------------------------------------------------------------------
# VMEM budgeting (per-generation; v5e/v6e = 128 MiB, v7x = 64 MiB per core)
# ---------------------------------------------------------------------------
def _vmem_limits():
    try:
        phys = int(pltpu.get_tpu_info().vmem_capacity_bytes)
    except Exception:
        phys = 64 * 1024 * 1024              # conservative (v7x per-core VMEM)
    budget = min(phys // 3, 40 * 1024 * 1024)
    limit = int(min(phys * 3 // 4, 100 * 1024 * 1024))
    return budget, limit


def _pick_nb(n, per_img_bytes, fixed_bytes, budget):
    """Largest divisor of n within budget; keep >=2 grid steps when possible."""
    cap = n if n < 2 else max(1, n // 2)     # >=2 steps -> both v7x cores busy
    best = 1
    for d in range(1, cap + 1):
        if n % d == 0 and fixed_bytes + d * per_img_bytes <= budget:
            best = d
    return best


def _nbytes(arrs):
    return sum(int(np.prod(a.shape)) * a.dtype.itemsize for a in arrs)


# ---------------------------------------------------------------------------
# stride == 1 fast path: fully lane-packed, roll-based depthwise taps
# ---------------------------------------------------------------------------
def _make_stride1_packed_kernel(Nb, H, W, Cin, Cmid, Cout):
    Lin, Lmid, Lout = W * Cin, W * Cmid, W * Cout

    def kernel(x_ref, w1_ref, b1_ref, w2_ref, b2_ref, w3_ref, b3_ref, out_ref):
        x = x_ref[...]                                       # (Nb, H, Lin) bf16
        xr = jnp.maximum(x, 0)                               # relu(x), bf16

        # conv1 (grouped 1x1 + shuffle + bn1 folded into block-diag weights)
        h1 = jnp.dot(xr.reshape(Nb * H, Lin), w1_ref[...],
                     preferred_element_type=jnp.float32)
        h1 = jnp.maximum(h1 + b1_ref[...], 0.0).reshape(Nb, H, Lmid)

        # conv2: 3x3 depthwise, stride 1, pad 1.
        # Column (dx) taps: XLU lane rolls; lanes that wrapped around the
        # image edge are zeroed directly in the per-lane tap weights.
        left = pltpu.roll(h1, Cmid, axis=2)          # column w-1 (wraps at w=0)
        right = pltpu.roll(h1, Lmid - Cmid, axis=2)  # column w+1 (wraps at w=W-1)

        def row_comb(dy):
            return (left * w2_ref[dy * 3 + 0] + h1 * w2_ref[dy * 3 + 1]
                    + right * w2_ref[dy * 3 + 2])

        r0, r1, r2 = row_comb(0), row_comb(1), row_comb(2)
        # Row (dy) taps: +/-1 row shifts with zero fill (no padded scratch).
        zrow = jnp.zeros((Nb, 1, Lmid), jnp.float32)
        from_above = jnp.concatenate([zrow, r0[:, :H - 1, :]], axis=1)
        from_below = jnp.concatenate([r2[:, 1:, :], zrow], axis=1)
        h2 = jnp.maximum(r1 + from_above + from_below + b2_ref[...], 0.0)

        # conv3 (grouped 1x1 + bn3), block-diag weights keep lanes dense
        h3 = jnp.dot(h2.reshape(Nb * H, Lmid).astype(jnp.bfloat16), w3_ref[...],
                     preferred_element_type=jnp.float32)
        h3 = (h3 + b3_ref[...]).reshape(Nb, H, Lout)

        # residual: out = conv path + relu(x)  (Cin == Cout); bf16 store
        out_ref[...] = (h3 + xr).astype(out_ref.dtype)

    return kernel


# ---------------------------------------------------------------------------
# generic NHWC kernel: stride 2 (concat shortcut) or large-channel stride 1
# ---------------------------------------------------------------------------
def _make_nhwc_kernel(Nb, H, W, Cin, Cmid, Cout, stride):
    Ho = (H - 1) // stride + 1
    Wo = (W - 1) // stride + 1
    concat_shortcut = (stride == 2)

    def _tap(ref, dy, dx):
        if stride == 1:
            return ref[:, pl.ds(dy, Ho), pl.ds(dx, Wo), :]
        return ref[:, pl.ds(dy, Ho, stride=2), pl.ds(dx, Wo, stride=2), :]

    def kernel(x_ref, w1_ref, b1_ref, w2_ref, b2_ref, w3_ref, b3_ref,
               out_ref, pad1_ref, *maybe_padx):
        x = x_ref[...]                                       # (Nb,H,W,Cin) bf16
        xr = jnp.maximum(x, 0)

        # conv1: one batched matmul over all Nb*H*W pixels
        h1 = jnp.dot(xr.reshape(Nb * H * W, Cin), w1_ref[...],
                     preferred_element_type=jnp.float32)
        h1 = jnp.maximum(h1 + b1_ref[...], 0.0).reshape(Nb, H, W, Cmid)

        # padded scratch for the depthwise conv: zero only the 1-px border
        zr = jnp.zeros((Nb, 1, W + 2, Cmid), jnp.float32)
        zc = jnp.zeros((Nb, H, 1, Cmid), jnp.float32)
        pad1_ref[:, 0:1, :, :] = zr
        pad1_ref[:, H + 1:H + 2, :, :] = zr
        pad1_ref[:, 1:H + 1, 0:1, :] = zc
        pad1_ref[:, 1:H + 1, W + 1:W + 2, :] = zc
        pad1_ref[:, 1:H + 1, 1:W + 1, :] = h1

        # conv2: 3x3 depthwise (bn2 scale folded into taps, b2 folded into acc)
        acc = jnp.broadcast_to(b2_ref[...], (Nb, Ho, Wo, Cmid))
        for dy in range(3):
            for dx in range(3):
                acc = acc + _tap(pad1_ref, dy, dx) * w2_ref[dy * 3 + dx]
        h2 = jnp.maximum(acc, 0.0)

        # conv3: one batched matmul over all Nb*Ho*Wo pixels
        h3 = jnp.dot(h2.reshape(Nb * Ho * Wo, Cmid).astype(jnp.bfloat16),
                     w3_ref[...], preferred_element_type=jnp.float32)
        h3 = (h3 + b3_ref[...]).reshape(Nb, Ho, Wo, Cout)

        if concat_shortcut:
            # shortcut: AvgPool2d(3, stride=2, pad=1); divisor is always 9
            padx_ref = maybe_padx[0]
            zrx = jnp.zeros((Nb, 1, W + 2, Cin), x.dtype)
            zcx = jnp.zeros((Nb, H, 1, Cin), x.dtype)
            padx_ref[:, 0:1, :, :] = zrx
            padx_ref[:, H + 1:H + 2, :, :] = zrx
            padx_ref[:, 1:H + 1, 0:1, :] = zcx
            padx_ref[:, 1:H + 1, W + 1:W + 2, :] = zcx
            padx_ref[:, 1:H + 1, 1:W + 1, :] = xr
            racc = jnp.zeros((Nb, Ho, Wo, Cin), jnp.float32)
            for dy in range(3):
                for dx in range(3):
                    racc = racc + _tap(padx_ref, dy, dx).astype(jnp.float32)
            res = racc * (1.0 / 9.0)
            out = jnp.concatenate([h3, res], axis=-1)        # cat([out, res], C)
        else:
            out = h3 + xr                                    # residual (Cin==Cout)
        out_ref[...] = out.astype(out_ref.dtype)

    return kernel


# ---------------------------------------------------------------------------
# NHWC-native wrapper (no layout round trips); bf16 in/out
# ---------------------------------------------------------------------------
def bottleneck_pallas_nhwc(x_nhwc, params, in_planes, out_planes, stride, groups,
                           is_last=False):
    N, H, W, C = x_nhwc.shape
    assert C == in_planes
    mid = out_planes // 4
    g = 1 if in_planes == 24 else groups
    Ho = (H - 1) // stride + 1
    Wo = (W - 1) // stride + 1
    if stride == 1:
        assert out_planes == in_planes, "residual add requires matching channels"

    # --- fold grouped convs / BN (inference) / channel shuffle on the host ---
    W1 = _grouped_1x1_to_dense(params['w1'], g)               # (Cin, mid)
    s1, b1 = _bn_scale_shift(params['bn1'])
    perm = np.arange(mid).reshape(g, mid // g).T.reshape(-1)  # channel shuffle
    W1 = W1[:, perm] * s1[perm][None, :]
    b1 = b1[perm]
    w2c = np.asarray(params['w2'])[:, 0]                      # (mid, 3, 3)
    s2, b2 = _bn_scale_shift(params['bn2'])
    w2taps = np.stack([w2c[:, dy, dx] * s2
                       for dy in range(3) for dx in range(3)]).astype(np.float32)
    W3 = _grouped_1x1_to_dense(params['w3'], groups)          # (mid, Cout)
    s3, b3 = _bn_scale_shift(params['bn3'])
    W3 = W3 * s3[None, :]

    x = x_nhwc.astype(jnp.bfloat16)
    budget, vmem_limit = _vmem_limits()

    # kron (block-diagonal) weights only pay off while they stay small.
    # (NOTE: the explicit zero blocks multiply all input columns, so Inf/NaN
    #  anywhere in a pixel row would spread across its output channels.)
    kron_bytes = 2 * (W * in_planes) * (W * mid) + 2 * (W * mid) * (W * out_planes)
    use_packed = (stride == 1 and W * in_planes <= 512
                  and kron_bytes <= 2 * 1024 * 1024)

    if use_packed:
        # ------------------ lane-packed stride-1 fast path ------------------
        Lin, Lmid, Lout = W * in_planes, W * mid, W * out_planes
        x_pk = x.reshape(N, H, Lin)                 # free (bitcast) reshape
        eye = np.eye(W, dtype=np.float32)
        W1b = jnp.asarray(np.kron(eye, W1), jnp.bfloat16)         # (Lin, Lmid)
        W3b = jnp.asarray(np.kron(eye, W3), jnp.bfloat16)         # (Lmid, Lout)
        b1b = jnp.asarray(np.tile(b1, W).reshape(1, Lmid), jnp.float32)
        b2b = jnp.asarray(np.tile(b2, W).reshape(1, Lmid), jnp.float32)
        b3b = jnp.asarray(np.tile(b3, W).reshape(1, Lout), jnp.float32)
        w2_lane = np.stack([np.tile(t, W) for t in w2taps])       # (9, Lmid)
        w2_lane[[0, 3, 6], :mid] = 0.0          # dx=0: zero wrapped w==0 lanes
        w2_lane[[2, 5, 8], Lmid - mid:] = 0.0   # dx=2: zero wrapped w==W-1 lanes
        w2b = jnp.asarray(w2_lane.reshape(9, 1, Lmid), jnp.float32)

        consts = [W1b, W3b, b1b, b2b, b3b, w2b]
        per_img = 2 * (H * Lin * 2 + H * Lout * 2)   # dbl-buffered bf16 in+out
        Nb = _pick_nb(N, per_img, 2 * _nbytes(consts), budget)
        grid = (N // Nb,)

        kernel = _make_stride1_packed_kernel(Nb, H, W, in_planes, mid, out_planes)
        out_pk = pl.pallas_call(
            kernel,
            out_shape=jax.ShapeDtypeStruct((N, H, Lout), jnp.bfloat16),
            grid=grid,
            in_specs=[
                pl.BlockSpec((Nb, H, Lin), lambda n: (n, 0, 0)),
                pl.BlockSpec((Lin, Lmid), lambda n: (0, 0)),
                pl.BlockSpec((1, Lmid), lambda n: (0, 0)),
                pl.BlockSpec((9, 1, Lmid), lambda n: (0, 0, 0)),
                pl.BlockSpec((1, Lmid), lambda n: (0, 0)),
                pl.BlockSpec((Lmid, Lout), lambda n: (0, 0)),
                pl.BlockSpec((1, Lout), lambda n: (0, 0)),
            ],
            out_specs=pl.BlockSpec((Nb, H, Lout), lambda n: (n, 0, 0)),
            compiler_params=pltpu.CompilerParams(
                dimension_semantics=("parallel",),
                vmem_limit_bytes=vmem_limit),
        )(x_pk, W1b, b1b, w2b, b2b, W3b, b3b)
        out_nhwc = out_pk.reshape(N, H, W, out_planes)   # free (bitcast) reshape
    else:
        # ------- generic NHWC path (stride 2, or big-channel stride 1) -------
        Ctot = out_planes + (in_planes if stride == 2 else 0)
        W1j = jnp.asarray(W1, jnp.bfloat16)
        W3j = jnp.asarray(W3, jnp.bfloat16)
        b1j = jnp.asarray(b1.reshape(1, mid), jnp.float32)
        b2j = jnp.asarray(b2.reshape(1, mid), jnp.float32)
        b3j = jnp.asarray(b3.reshape(1, out_planes), jnp.float32)
        w2j = jnp.asarray(w2taps.reshape(9, 1, mid), jnp.float32)

        consts = [W1j, W3j, b1j, b2j, b3j, w2j]
        per_img = (2 * (H * W * in_planes * 2 + Ho * Wo * Ctot * 2)
                   + (H + 2) * (W + 2) * mid * 4)
        if stride == 2:
            per_img += (H + 2) * (W + 2) * in_planes * 2
        Nb = _pick_nb(N, per_img, 2 * _nbytes(consts), budget)
        grid = (N // Nb,)

        scratch = [pltpu.VMEM((Nb, H + 2, W + 2, mid), jnp.float32)]
        if stride == 2:
            scratch.append(pltpu.VMEM((Nb, H + 2, W + 2, in_planes), jnp.bfloat16))

        kernel = _make_nhwc_kernel(Nb, H, W, in_planes, mid, out_planes, stride)
        out_nhwc = pl.pallas_call(
            kernel,
            out_shape=jax.ShapeDtypeStruct((N, Ho, Wo, Ctot), jnp.bfloat16),
            grid=grid,
            in_specs=[
                pl.BlockSpec((Nb, H, W, in_planes), lambda n: (n, 0, 0, 0)),
                pl.BlockSpec((in_planes, mid), lambda n: (0, 0)),
                pl.BlockSpec((1, mid), lambda n: (0, 0)),
                pl.BlockSpec((9, 1, mid), lambda n: (0, 0, 0)),
                pl.BlockSpec((1, mid), lambda n: (0, 0)),
                pl.BlockSpec((mid, out_planes), lambda n: (0, 0)),
                pl.BlockSpec((1, out_planes), lambda n: (0, 0)),
            ],
            out_specs=pl.BlockSpec((Nb, Ho, Wo, Ctot), lambda n: (n, 0, 0, 0)),
            scratch_shapes=scratch,
            compiler_params=pltpu.CompilerParams(
                dimension_semantics=("parallel",),
                vmem_limit_bytes=vmem_limit),
        )(x, W1j, b1j, w2j, b2j, W3j, b3j)

    if is_last:
        return out_nhwc, out_nhwc    # preact is the same tensor in this module
    return out_nhwc


# ---------------------------------------------------------------------------
# NCHW compatibility adapter (demo-only; real stacks should chain NHWC blocks)
# ---------------------------------------------------------------------------
def bottleneck_pallas(x_nchw, params, in_planes, out_planes, stride, groups,
                      is_last=False):
    x_nhwc = jnp.transpose(x_nchw, (0, 2, 3, 1))
    res = bottleneck_pallas_nhwc(x_nhwc, params, in_planes, out_planes,
                                 stride, groups, is_last)
    if is_last:
        o, p = res
        return (jnp.transpose(o, (0, 3, 1, 2)), jnp.transpose(p, (0, 3, 1, 2)))
    return jnp.transpose(res, (0, 3, 1, 2))


# ---------------------------------------------------------------------------
# Pure-JAX reference (mirrors the torch forward, BN in inference mode, f32)
# ---------------------------------------------------------------------------
def bottleneck_reference(x, params, in_planes, out_planes, stride, groups):
    mid = out_planes // 4
    g = 1 if in_planes == 24 else groups
    eps = 1e-5

    def bn(h, p):
        sc = (p['gamma'] / jnp.sqrt(p['var'] + eps)).reshape(1, -1, 1, 1)
        sh = p['beta'].reshape(1, -1, 1, 1) - p['mean'].reshape(1, -1, 1, 1) * sc
        return h * sc + sh

    def conv(h, w, st, pad, fg):
        return lax.conv_general_dilated(h, w, (st, st), [(pad, pad), (pad, pad)],
                                        feature_group_count=fg,
                                        dimension_numbers=('NCHW', 'OIHW', 'NCHW'))

    x = jnp.maximum(x, 0.0)
    out = jnp.maximum(bn(conv(x, params['w1'], 1, 0, g), params['bn1']), 0.0)
    N, C, H, W = out.shape
    out = out.reshape(N, g, C // g, H, W).transpose(0, 2, 1, 3, 4).reshape(N, C, H, W)
    out = jnp.maximum(bn(conv(out, params['w2'], stride, 1, mid), params['bn2']), 0.0)
    out = bn(conv(out, params['w3'], 1, 0, groups), params['bn3'])
    if stride == 2:
        s = lax.reduce_window(x, 0.0, lax.add, (1, 1, 3, 3), (1, 1, 2, 2),
                              [(0, 0), (0, 0), (1, 1), (1, 1)])
        return jnp.concatenate([out, s / 9.0], axis=1)
    return out + x


# ---------------------------------------------------------------------------
if __name__ == "__main__":
    key = jax.random.PRNGKey(0)
    configs = [
        dict(in_planes=16, out_planes=16, stride=1, groups=2, N=2, H=16, W=16),
        dict(in_planes=16, out_planes=32, stride=2, groups=2, N=2, H=16, W=16),
        dict(in_planes=24, out_planes=24, stride=1, groups=3, N=2, H=8, W=8),
    ]
    ok = True
    for cfg in configs:
        kp, kx, key = jax.random.split(key, 3)
        params, _ = init_params(kp, cfg['in_planes'], cfg['out_planes'], cfg['groups'])
        x = jax.random.normal(kx, (cfg['N'], cfg['in_planes'], cfg['H'], cfg['W']),
                              jnp.float32)
        # feed the same bf16-rounded input to both paths (kernel I/O is bf16)
        x = x.astype(jnp.bfloat16).astype(jnp.float32)
        out = bottleneck_pallas(x, params, cfg['in_planes'], cfg['out_planes'],
                                cfg['stride'], cfg['groups'])
        out = jax.block_until_ready(out)
        ref = bottleneck_reference(x, params, cfg['in_planes'], cfg['out_planes'],
                                   cfg['stride'], cfg['groups'])
        o = np.asarray(out.astype(jnp.float32))
        r = np.asarray(ref, np.float32)
        # bf16 activations/weights in the matmul path + bf16 output store
        if not np.allclose(o, r, atol=4e-2, rtol=4e-2):
            ok = False
            print("MISMATCH", cfg, float(np.max(np.abs(o - r))))
    if ok:
        print("KERNEL_OK")
</pallas_src>

<mosaic_0001>
module attributes {stable_mosaic.version = 11 : i64} {
  func.func @kernel(%arg0: i32, %arg1: memref<1x16x256xbf16, #tpu.memory_space<vmem>>, %arg2: memref<256x64xbf16, #tpu.memory_space<vmem>>, %arg3: memref<1x64xf32, #tpu.memory_space<vmem>>, %arg4: memref<9x1x64xf32, #tpu.memory_space<vmem>>, %arg5: memref<1x64xf32, #tpu.memory_space<vmem>>, %arg6: memref<64x256xbf16, #tpu.memory_space<vmem>>, %arg7: memref<1x256xf32, #tpu.memory_space<vmem>>, %arg8: memref<1x16x256xbf16, #tpu.memory_space<vmem>>) attributes {dimension_semantics = [#tpu.dimension_semantics<parallel>], iteration_bounds = array<i64: 2>, scalar_prefetch = 0 : i64, scratch_operands = 0 : i64, tpu.core_type = #tpu.core_type<tc>, window_params = [{transform_indices = @transform_0, window_bounds = array<i64: 1, 16, 256>}, {pipeline_mode = #tpu.pipeline_mode<synchronous>, transform_indices = @transform_1, window_bounds = array<i64: 256, 64>}, {pipeline_mode = #tpu.pipeline_mode<synchronous>, transform_indices = @transform_2, window_bounds = array<i64: 1, 64>}, {pipeline_mode = #tpu.pipeline_mode<synchronous>, transform_indices = @transform_3, window_bounds = array<i64: 9, 1, 64>}, {pipeline_mode = #tpu.pipeline_mode<synchronous>, transform_indices = @transform_4, window_bounds = array<i64: 1, 64>}, {pipeline_mode = #tpu.pipeline_mode<synchronous>, transform_indices = @transform_5, window_bounds = array<i64: 64, 256>}, {pipeline_mode = #tpu.pipeline_mode<synchronous>, transform_indices = @transform_6, window_bounds = array<i64: 1, 256>}, {transform_indices = @transform_7, window_bounds = array<i64: 1, 16, 256>}]} {
    %c0 = arith.constant 0 : index
    %c0_0 = arith.constant 0 : index
    %c0_1 = arith.constant 0 : index
    %0 = vector.load %arg1[%c0, %c0_0, %c0_1] : memref<1x16x256xbf16, #tpu.memory_space<vmem>>, vector<1x16x256xbf16>
    %cst = arith.constant 0.000000e+00 : bf16
    %1 = vector.broadcast %cst : bf16 to vector<1x16x256xbf16>
    %2 = arith.maximumf %0, %1 : vector<1x16x256xbf16>
    %3 = vector.shape_cast %2 : vector<1x16x256xbf16> to vector<16x256xbf16>
    %c0_2 = arith.constant 0 : index
    %c0_3 = arith.constant 0 : index
    %4 = vector.load %arg2[%c0_2, %c0_3] : memref<256x64xbf16, #tpu.memory_space<vmem>>, vector<256x64xbf16>
    %cst_4 = arith.constant dense<0.000000e+00> : vector<16x64xf32>
    %5 = tpu.matmul %3, %4, %cst_4 {dimension_numbers = #tpu.dot_dimension_numbers<[1], [0], [0], [1], [0, 0, 1, 1], [], []>} : vector<16x256xbf16>, vector<256x64xbf16>, vector<16x64xf32> -> vector<16x64xf32>
    %c0_5 = arith.constant 0 : index
    %c0_6 = arith.constant 0 : index
    %6 = vector.load %arg3[%c0_5, %c0_6] : memref<1x64xf32, #tpu.memory_space<vmem>>, vector<1x64xf32>
    %7 = vector.broadcast %6 : vector<1x64xf32> to vector<16x64xf32>
    %8 = arith.addf %5, %7 : vector<16x64xf32>
    %cst_7 = arith.constant 0.000000e+00 : f32
    %9 = vector.broadcast %cst_7 : f32 to vector<16x64xf32>
    %10 = arith.maximumf %8, %9 : vector<16x64xf32>
    %11 = vector.shape_cast %10 : vector<16x64xf32> to vector<1x16x64xf32>
    %c4_i32 = arith.constant 4 : i32
    %12 = tpu.dynamic_rotate %11 by %c4_i32 dim 2 : vector<1x16x64xf32>, i32 -> vector<1x16x64xf32>
    %c60_i32 = arith.constant 60 : i32
    %13 = tpu.dynamic_rotate %11 by %c60_i32 dim 2 : vector<1x16x64xf32>, i32 -> vector<1x16x64xf32>
    %c0_8 = arith.constant 0 : index
    %c0_9 = arith.constant 0 : index
    %c0_10 = arith.constant 0 : index
    %14 = vector.load %arg4[%c0_8, %c0_9, %c0_10] : memref<9x1x64xf32, #tpu.memory_space<vmem>>, vector<1x1x64xf32>
    %15 = vector.shape_cast %14 : vector<1x1x64xf32> to vector<1x64xf32>
    %16 = vector.shape_cast %15 : vector<1x64xf32> to vector<1x1x64xf32>
    %17 = vector.broadcast %16 : vector<1x1x64xf32> to vector<1x16x64xf32>
    %18 = arith.mulf %12, %17 : vector<1x16x64xf32>
    %c1 = arith.constant 1 : index
    %c0_11 = arith.constant 0 : index
    %c0_12 = arith.constant 0 : index
    %19 = vector.load %arg4[%c1, %c0_11, %c0_12] : memref<9x1x64xf32, #tpu.memory_space<vmem>>, vector<1x1x64xf32>
    %20 = vector.shape_cast %19 : vector<1x1x64xf32> to vector<1x64xf32>
    %21 = vector.shape_cast %20 : vector<1x64xf32> to vector<1x1x64xf32>
    %22 = vector.broadcast %21 : vector<1x1x64xf32> to vector<1x16x64xf32>
    %23 = arith.mulf %11, %22 : vector<1x16x64xf32>
    %24 = arith.addf %18, %23 : vector<1x16x64xf32>
    %c2 = arith.constant 2 : index
    %c0_13 = arith.constant 0 : index
    %c0_14 = arith.constant 0 : index
    %25 = vector.load %arg4[%c2, %c0_13, %c0_14] : memref<9x1x64xf32, #tpu.memory_space<vmem>>, vector<1x1x64xf32>
    %26 = vector.shape_cast %25 : vector<1x1x64xf32> to vector<1x64xf32>
    %27 = vector.shape_cast %26 : vector<1x64xf32> to vector<1x1x64xf32>
    %28 = vector.broadcast %27 : vector<1x1x64xf32> to vector<1x16x64xf32>
    %29 = arith.mulf %13, %28 : vector<1x16x64xf32>
    %30 = arith.addf %24, %29 : vector<1x16x64xf32>
    %c3 = arith.constant 3 : index
    %c0_15 = arith.constant 0 : index
    %c0_16 = arith.constant 0 : index
    %31 = vector.load %arg4[%c3, %c0_15, %c0_16] : memref<9x1x64xf32, #tpu.memory_space<vmem>>, vector<1x1x64xf32>
    %32 = vector.shape_cast %31 : vector<1x1x64xf32> to vector<1x64xf32>
    %33 = vector.shape_cast %32 : vector<1x64xf32> to vector<1x1x64xf32>
    %34 = vector.broadcast %33 : vector<1x1x64xf32> to vector<1x16x64xf32>
    %35 = arith.mulf %12, %34 : vector<1x16x64xf32>
    %c4 = arith.constant 4 : index
    %c0_17 = arith.constant 0 : index
    %c0_18 = arith.constant 0 : index
    %36 = vector.load %arg4[%c4, %c0_17, %c0_18] : memref<9x1x64xf32, #tpu.memory_space<vmem>>, vector<1x1x64xf32>
    %37 = vector.shape_cast %36 : vector<1x1x64xf32> to vector<1x64xf32>
    %38 = vector.shape_cast %37 : vector<1x64xf32> to vector<1x1x64xf32>
    %39 = vector.broadcast %38 : vector<1x1x64xf32> to vector<1x16x64xf32>
    %40 = arith.mulf %11, %39 : vector<1x16x64xf32>
    %41 = arith.addf %35, %40 : vector<1x16x64xf32>
    %c5 = arith.constant 5 : index
    %c0_19 = arith.constant 0 : index
    %c0_20 = arith.constant 0 : index
    %42 = vector.load %arg4[%c5, %c0_19, %c0_20] : memref<9x1x64xf32, #tpu.memory_space<vmem>>, vector<1x1x64xf32>
    %43 = vector.shape_cast %42 : vector<1x1x64xf32> to vector<1x64xf32>
    %44 = vector.shape_cast %43 : vector<1x64xf32> to vector<1x1x64xf32>
    %45 = vector.broadcast %44 : vector<1x1x64xf32> to vector<1x16x64xf32>
    %46 = arith.mulf %13, %45 : vector<1x16x64xf32>
    %47 = arith.addf %41, %46 : vector<1x16x64xf32>
    %c6 = arith.constant 6 : index
    %c0_21 = arith.constant 0 : index
    %c0_22 = arith.constant 0 : index
    %48 = vector.load %arg4[%c6, %c0_21, %c0_22] : memref<9x1x64xf32, #tpu.memory_space<vmem>>, vector<1x1x64xf32>
    %49 = vector.shape_cast %48 : vector<1x1x64xf32> to vector<1x64xf32>
    %50 = vector.shape_cast %49 : vector<1x64xf32> to vector<1x1x64xf32>
    %51 = vector.broadcast %50 : vector<1x1x64xf32> to vector<1x16x64xf32>
    %52 = arith.mulf %12, %51 : vector<1x16x64xf32>
    %c7 = arith.constant 7 : index
    %c0_23 = arith.constant 0 : index
    %c0_24 = arith.constant 0 : index
    %53 = vector.load %arg4[%c7, %c0_23, %c0_24] : memref<9x1x64xf32, #tpu.memory_space<vmem>>, vector<1x1x64xf32>
    %54 = vector.shape_cast %53 : vector<1x1x64xf32> to vector<1x64xf32>
    %55 = vector.shape_cast %54 : vector<1x64xf32> to vector<1x1x64xf32>
    %56 = vector.broadcast %55 : vector<1x1x64xf32> to vector<1x16x64xf32>
    %57 = arith.mulf %11, %56 : vector<1x16x64xf32>
    %58 = arith.addf %52, %57 : vector<1x16x64xf32>
    %c8 = arith.constant 8 : index
    %c0_25 = arith.constant 0 : index
    %c0_26 = arith.constant 0 : index
    %59 = vector.load %arg4[%c8, %c0_25, %c0_26] : memref<9x1x64xf32, #tpu.memory_space<vmem>>, vector<1x1x64xf32>
    %60 = vector.shape_cast %59 : vector<1x1x64xf32> to vector<1x64xf32>
    %61 = vector.shape_cast %60 : vector<1x64xf32> to vector<1x1x64xf32>
    %62 = vector.broadcast %61 : vector<1x1x64xf32> to vector<1x16x64xf32>
    %63 = arith.mulf %13, %62 : vector<1x16x64xf32>
    %64 = arith.addf %58, %63 : vector<1x16x64xf32>
    %cst_27 = arith.constant 0.000000e+00 : f32
    %65 = vector.broadcast %cst_27 : f32 to vector<1x1x64xf32>
    %66 = vector.extract_strided_slice %30 {offsets = [0, 0, 0], sizes = [1, 15, 64], strides = [1, 1, 1]} : vector<1x16x64xf32> to vector<1x15x64xf32>
    %67 = tpu.concatenate %65, %66 in 1 : vector<1x1x64xf32>, vector<1x15x64xf32> -> vector<1x16x64xf32>
    %68 = vector.extract_strided_slice %64 {offsets = [0, 1, 0], sizes = [1, 15, 64], strides = [1, 1, 1]} : vector<1x16x64xf32> to vector<1x15x64xf32>
    %69 = tpu.concatenate %68, %65 in 1 : vector<1x15x64xf32>, vector<1x1x64xf32> -> vector<1x16x64xf32>
    %70 = arith.addf %47, %67 : vector<1x16x64xf32>
    %71 = arith.addf %70, %69 : vector<1x16x64xf32>
    %c0_28 = arith.constant 0 : index
    %c0_29 = arith.constant 0 : index
    %72 = vector.load %arg5[%c0_28, %c0_29] : memref<1x64xf32, #tpu.memory_space<vmem>>, vector<1x64xf32>
    %73 = vector.shape_cast %72 : vector<1x64xf32> to vector<1x1x64xf32>
    %74 = vector.broadcast %73 : vector<1x1x64xf32> to vector<1x16x64xf32>
    %75 = arith.addf %71, %74 : vector<1x16x64xf32>
    %cst_30 = arith.constant 0.000000e+00 : f32
    %76 = vector.broadcast %cst_30 : f32 to vector<1x16x64xf32>
    %77 = arith.maximumf %75, %76 : vector<1x16x64xf32>
    %78 = vector.shape_cast %77 : vector<1x16x64xf32> to vector<16x64xf32>
    %79 = arith.truncf %78 : vector<16x64xf32> to vector<16x64xbf16>
    %c0_31 = arith.constant 0 : index
    %c0_32 = arith.constant 0 : index
    %80 = vector.load %arg6[%c0_31, %c0_32] : memref<64x256xbf16, #tpu.memory_space<vmem>>, vector<64x256xbf16>
    %cst_33 = arith.constant dense<0.000000e+00> : vector<16x256xf32>
    %81 = tpu.matmul %79, %80, %cst_33 {dimension_numbers = #tpu.dot_dimension_numbers<[1], [0], [0], [1], [0, 0, 1, 1], [], []>} : vector<16x64xbf16>, vector<64x256xbf16>, vector<16x256xf32> -> vector<16x256xf32>
    %c0_34 = arith.constant 0 : index
    %c0_35 = arith.constant 0 : index
    %82 = vector.load %arg7[%c0_34, %c0_35] : memref<1x256xf32, #tpu.memory_space<vmem>>, vector<1x256xf32>
    %83 = vector.broadcast %82 : vector<1x256xf32> to vector<16x256xf32>
    %84 = arith.addf %81, %83 : vector<16x256xf32>
    %85 = vector.shape_cast %84 : vector<16x256xf32> to vector<1x16x256xf32>
    %86 = arith.extf %2 : vector<1x16x256xbf16> to vector<1x16x256xf32>
    %87 = arith.addf %85, %86 : vector<1x16x256xf32>
    %88 = arith.truncf %87 : vector<1x16x256xf32> to vector<1x16x256xbf16>
    %c0_36 = arith.constant 0 : index
    %c0_37 = arith.constant 0 : index
    %c0_38 = arith.constant 0 : index
    %89 = vector.load %arg8[%c0_36, %c0_37, %c0_38] : memref<1x16x256xbf16, #tpu.memory_space<vmem>>, vector<1x16x256xbf16>
    tpu.vector_store %arg8[%c0_36, %c0_37, %c0_38], %88 {strides = array<i32>} : memref<1x16x256xbf16, #tpu.memory_space<vmem>>, vector<1x16x256xbf16>,
    return
  }
  func.func @transform_0(%arg0: i32) -> (i32, i32, i32) {
    %c0_i32 = arith.constant 0 : i32
    %c0_i32_0 = arith.constant 0 : i32
    %c0_i32_1 = arith.constant 0 : i32
    return %arg0, %c0_i32, %c0_i32_0 : i32, i32, i32
  }
  func.func @transform_1(%arg0: i32) -> (i32, i32) {
    %c0_i32 = arith.constant 0 : i32
    %c0_i32_0 = arith.constant 0 : i32
    %c0_i32_1 = arith.constant 0 : i32
    return %c0_i32, %c0_i32_0 : i32, i32
  }
  func.func @transform_2(%arg0: i32) -> (i32, i32) {
    %c0_i32 = arith.constant 0 : i32
    %c0_i32_0 = arith.constant 0 : i32
    %c0_i32_1 = arith.constant 0 : i32
    return %c0_i32, %c0_i32_0 : i32, i32
  }
  func.func @transform_3(%arg0: i32) -> (i32, i32, i32) {
    %c0_i32 = arith.constant 0 : i32
    %c0_i32_0 = arith.constant 0 : i32
    %c0_i32_1 = arith.constant 0 : i32
    %c0_i32_2 = arith.constant 0 : i32
    return %c0_i32, %c0_i32_0, %c0_i32_1 : i32, i32, i32
  }
  func.func @transform_4(%arg0: i32) -> (i32, i32) {
    %c0_i32 = arith.constant 0 : i32
    %c0_i32_0 = arith.constant 0 : i32
    %c0_i32_1 = arith.constant 0 : i32
    return %c0_i32, %c0_i32_0 : i32, i32
  }
  func.func @transform_5(%arg0: i32) -> (i32, i32) {
    %c0_i32 = arith.constant 0 : i32
    %c0_i32_0 = arith.constant 0 : i32
    %c0_i32_1 = arith.constant 0 : i32
    return %c0_i32, %c0_i32_0 : i32, i32
  }
  func.func @transform_6(%arg0: i32) -> (i32, i32) {
    %c0_i32 = arith.constant 0 : i32
    %c0_i32_0 = arith.constant 0 : i32
    %c0_i32_1 = arith.constant 0 : i32
    return %c0_i32, %c0_i32_0 : i32, i32
  }
  func.func @transform_7(%arg0: i32) -> (i32, i32, i32) {
    %c0_i32 = arith.constant 0 : i32
    %c0_i32_0 = arith.constant 0 : i32
    %c0_i32_1 = arith.constant 0 : i32
    return %arg0, %c0_i32, %c0_i32_0 : i32, i32, i32
  }
}

</mosaic_0001>

<llo_original>
// kernel: tpu_custom_call.1
$region0: #{tpu_custom_call.1}
  #allocation0 [shape = 'u32[]', space=smem, size = 0x4, offset = 0x4, fixed_abs, tag = 'smem constant byte address 0x4 - core index']
  #allocation1 [shape = 'u32[72,128]{1,0:T(1,128)}', space=vmem, size = 0x9000, scoped, tag = 'internal scratch']
  %s0 = inlined_call_operand.vmem [shape: bf16[2,16,256], index: 0, kind: input, shape index: {}]
  %s1 = inlined_call_operand.vmem [shape: bf16[256,64], index: 1, kind: input, shape index: {}]
  %s2 = inlined_call_operand.vmem [shape: f32[1,64], index: 2, kind: input, shape index: {}]
  %s3 = inlined_call_operand.vmem [shape: f32[9,1,64], index: 3, kind: input, shape index: {}]
  %s4 = inlined_call_operand.vmem [shape: f32[1,64], index: 4, kind: input, shape index: {}]
  %s5 = inlined_call_operand.vmem [shape: bf16[64,256], index: 5, kind: input, shape index: {}]
  %s6 = inlined_call_operand.vmem [shape: f32[1,256], index: 6, kind: input, shape index: {}]
  %s7 = inlined_call_operand.hbm [shape: bf16[2,16,256], index: 7, kind: output, shape index: {}]
  %s8 = sld [smem:[#allocation0]]
  $region61: #{tpu_custom_call.1} parent=0
    _
  %s10 = ssub.s32 1, %s8
  %s11 = scalar_select 0, %s10, %s8
  $region1: #{tpu_custom_call.1} parent=0
    #allocation2 [shape = 'u8[16384]{0}', space=vmem, size = 0x4000, scoped, tag = 'output window, operand 0']
    #allocation3 [shape = 's32[2]{0}', space=sflag, size = 0x8, scoped, tag = 'scoped memory for tpu_custom_call.1']
    %12 = vsyncpa [#allocation3], 0
    %s13 = scalar_lea.sflag [#allocation3], 1
    %14 = vsyncpa %s13, 0
    loop: start=0, step=1, limit=4
    $region2: #{tpu_custom_call.1} parent=1 // loop_pre_header
      _
    $region3: #{tpu_custom_call.1} parent=1 // loop_header
      %s16 = sphi 0, %s20
      %p17 = scmp.ge.s32.totalorder %s16, 4
      %s26 = sphi 0, %s28
      %s29 = sphi 0, %s26
      %s30 = sphi 0, %s29
      %s46 = sphi 0, %s30
      %s50 = sphi 0, %s50
      %s52 = sphi 0, %s50
      %s53 = sphi 0, %s52
      %s67 = sphi 0, %s53
      %s71 = sphi 0, %s71
      %s73 = sphi 0, %s71
      %s74 = sphi 0, %s73
      %s88 = sphi 0, %s74
      %s92 = sphi 0, %s92
      %s94 = sphi 0, %s92
      %s95 = sphi 0, %s94
      %s109 = sphi 0, %s95
      %s113 = sphi 0, %s113
      %s115 = sphi 0, %s113
      %s116 = sphi 0, %s115
      %s130 = sphi 0, %s116
      %s134 = sphi 0, %s134
      %s136 = sphi 0, %s134
      %s137 = sphi 0, %s136
      %s151 = sphi 0, %s137
      %s155 = sphi 0, %s155
      %s157 = sphi 0, %s155
      %s158 = sphi 0, %s157
      %s172 = sphi 0, %s158
      %s178 = sphi 0, %s180
      %s181 = sphi 0, %s178
      %s182 = sphi 0, %s181
      %s198 = sphi 0, %s182
    $region4: #{tpu_custom_call.1} parent=1 // loop_header_branch
      %19 = sbr.rel (%p17) target = $region8
    $region5: #{tpu_custom_call.1} parent=1 // loop_body
      %s21 = ssub.s32 %s16, 1
      %s22 = ssub.s32 %s16, 2
      %s23 = sadd.s32 %s16, 1
      %s24 = ssub.s32 %s16, %s23
      %p25 = scmp.eq.s32.totalorder %s24, 0
      %s27 = sadd.s32 %s26, 1
      %s28 = scalar_select %p25, %s26, %s27
      %p31 = pneg %p25
      %p32 = scmp.eq.s32.totalorder %s16, 1
      %p33 = por %p31, %p32
      %p34 = scmp.ne.s32.totalorder %s26, %s29
      %p35 = scmp.eq.s32.totalorder %s16, 0
      %p36 = por %p34, %p35
      %p37 = scmp.ne.s32.totalorder %s26, %s29
      %p38 = scmp.eq.s32.totalorder %s21, 1
      %p39 = por %p37, %p38
      %p40 = scmp.ne.s32.totalorder %s29, %s30
      %p41 = scmp.eq.s32.totalorder %s21, 0
      %p42 = por %p40, %p41
      %p43 = scmp.ne.s32.totalorder %s29, %s30
      %p44 = scmp.eq.s32.totalorder %s22, 1
      %p45 = por %p43, %p44
      %p47 = scmp.ne.s32.totalorder %s30, %s46
      %p48 = scmp.eq.s32.totalorder %s22, 0
      %p49 = por %p47, %p48
      %s51 = sadd.s32 %s50, 1
      %p54 = scmp.eq.s32.totalorder %s16, 1
      %p55 = scmp.ne.s32.totalorder %s50, %s52
      %p56 = scmp.eq.s32.totalorder %s16, 0
      %p57 = por %p55, %p56
      %p58 = scmp.ne.s32.totalorder %s50, %s52
      %p59 = scmp.eq.s32.totalorder %s21, 1
      %p60 = por %p58, %p59
      %p61 = scmp.ne.s32.totalorder %s52, %s53
      %p62 = scmp.eq.s32.totalorder %s21, 0
      %p63 = por %p61, %p62
      %p64 = scmp.ne.s32.totalorder %s52, %s53
      %p65 = scmp.eq.s32.totalorder %s22, 1
      %p66 = por %p64, %p65
      %p68 = scmp.ne.s32.totalorder %s53, %s67
      %p69 = scmp.eq.s32.totalorder %s22, 0
      %p70 = por %p68, %p69
      %s72 = sadd.s32 %s71, 1
      %p75 = scmp.eq.s32.totalorder %s16, 1
      %p76 = scmp.ne.s32.totalorder %s71, %s73
      %p77 = scmp.eq.s32.totalorder %s16, 0
      %p78 = por %p76, %p77
      %p79 = scmp.ne.s32.totalorder %s71, %s73
      %p80 = scmp.eq.s32.totalorder %s21, 1
      %p81 = por %p79, %p80
      %p82 = scmp.ne.s32.totalorder %s73, %s74
      %p83 = scmp.eq.s32.totalorder %s21, 0
      %p84 = por %p82, %p83
      %p85 = scmp.ne.s32.totalorder %s73, %s74
      %p86 = scmp.eq.s32.totalorder %s22, 1
      %p87 = por %p85, %p86
      %p89 = scmp.ne.s32.totalorder %s74, %s88
      %p90 = scmp.eq.s32.totalorder %s22, 0
      %p91 = por %p89, %p90
      %s93 = sadd.s32 %s92, 1
      %p96 = scmp.eq.s32.totalorder %s16, 1
      %p97 = scmp.ne.s32.totalorder %s92, %s94
      %p98 = scmp.eq.s32.totalorder %s16, 0
      %p99 = por %p97, %p98
      %p100 = scmp.ne.s32.totalorder %s92, %s94
      %p101 = scmp.eq.s32.totalorder %s21, 1
      %p102 = por %p100, %p101
      %p103 = scmp.ne.s32.totalorder %s94, %s95
      %p104 = scmp.eq.s32.totalorder %s21, 0
      %p105 = por %p103, %p104
      %p106 = scmp.ne.s32.totalorder %s94, %s95
      %p107 = scmp.eq.s32.totalorder %s22, 1
      %p108 = por %p106, %p107
      %p110 = scmp.ne.s32.totalorder %s95, %s109
      %p111 = scmp.eq.s32.totalorder %s22, 0
      %p112 = por %p110, %p111
      %s114 = sadd.s32 %s113, 1
      %p117 = scmp.eq.s32.totalorder %s16, 1
      %p118 = scmp.ne.s32.totalorder %s113, %s115
      %p119 = scmp.eq.s32.totalorder %s16, 0
      %p120 = por %p118, %p119
      %p121 = scmp.ne.s32.totalorder %s113, %s115
      %p122 = scmp.eq.s32.totalorder %s21, 1
      %p123 = por %p121, %p122
      %p124 = scmp.ne.s32.totalorder %s115, %s116
      %p125 = scmp.eq.s32.totalorder %s21, 0
      %p126 = por %p124, %p125
      %p127 = scmp.ne.s32.totalorder %s115, %s116
      %p128 = scmp.eq.s32.totalorder %s22, 1
      %p129 = por %p127, %p128
      %p131 = scmp.ne.s32.totalorder %s116, %s130
      %p132 = scmp.eq.s32.totalorder %s22, 0
      %p133 = por %p131, %p132
      %s135 = sadd.s32 %s134, 1
      %p138 = scmp.eq.s32.totalorder %s16, 1
      %p139 = scmp.ne.s32.totalorder %s134, %s136
      %p140 = scmp.eq.s32.totalorder %s16, 0
      %p141 = por %p139, %p140
      %p142 = scmp.ne.s32.totalorder %s134, %s136
      %p143 = scmp.eq.s32.totalorder %s21, 1
      %p144 = por %p142, %p143
      %p145 = scmp.ne.s32.totalorder %s136, %s137
      %p146 = scmp.eq.s32.totalorder %s21, 0
      %p147 = por %p145, %p146
      %p148 = scmp.ne.s32.totalorder %s136, %s137
      %p149 = scmp.eq.s32.totalorder %s22, 1
      %p150 = por %p148, %p149
      %p152 = scmp.ne.s32.totalorder %s137, %s151
      %p153 = scmp.eq.s32.totalorder %s22, 0
      %p154 = por %p152, %p153
      %s156 = sadd.s32 %s155, 1
      %p159 = scmp.eq.s32.totalorder %s16, 1
      %p160 = scmp.ne.s32.totalorder %s155, %s157
      %p161 = scmp.eq.s32.totalorder %s16, 0
      %p162 = por %p160, %p161
      %p163 = scmp.ne.s32.totalorder %s155, %s157
      %p164 = scmp.eq.s32.totalorder %s21, 1
      %p165 = por %p163, %p164
      %p166 = scmp.ne.s32.totalorder %s157, %s158
      %p167 = scmp.eq.s32.totalorder %s21, 0
      %p168 = por %p166, %p167
      %p169 = scmp.ne.s32.totalorder %s157, %s158
      %p170 = scmp.eq.s32.totalorder %s22, 1
      %p171 = por %p169, %p170
      %p173 = scmp.ne.s32.totalorder %s158, %s172
      %p174 = scmp.eq.s32.totalorder %s22, 0
      %p175 = por %p173, %p174
      %s176 = ssub.s32 %s16, %s23
      %p177 = scmp.eq.s32.totalorder %s176, 0
      %s179 = sadd.s32 %s178, 1
      %s180 = scalar_select %p177, %s178, %s179
      %p183 = pneg %p177
      %p184 = scmp.eq.s32.totalorder %s16, 1
      %p185 = por %p183, %p184
      %p186 = scmp.ne.s32.totalorder %s178, %s181
      %p187 = scmp.eq.s32.totalorder %s16, 0
      %p188 = por %p186, %p187
      %p189 = scmp.ne.s32.totalorder %s178, %s181
      %p190 = scmp.eq.s32.totalorder %s21, 1
      %p191 = por %p189, %p190
      %p192 = scmp.ne.s32.totalorder %s181, %s182
      %p193 = scmp.eq.s32.totalorder %s21, 0
      %p194 = por %p192, %p193
      %p195 = scmp.ne.s32.totalorder %s181, %s182
      %p196 = scmp.eq.s32.totalorder %s22, 1
      %p197 = por %p195, %p196
      %p199 = scmp.ne.s32.totalorder %s182, %s198
      %p200 = scmp.eq.s32.totalorder %s22, 0
      %p201 = por %p199, %p200
      %p202 = scmp.le.s32.totalorder 1, %s16
      %p203 = scmp.lt.s32.totalorder %s16, 3
      %p204 = pnand %p202, %p203
      %p205 = pneg %p204
      // Predicated region
      $region9: #{tpu_custom_call.1} parent=5 // pred_check
        _
      $region10: #{tpu_custom_call.1} parent=5 // pred_check_branch
        %207 = sbr.rel (%p204) target = $region12
      $region11: #{tpu_custom_call.1} parent=5 // pred_region
        %s208 = ssub.s32 %s16, 1
        // Predicated region
        $region13: #{tpu_custom_call.1} parent=11 // pred_check
          %p209 = pneg %p63
        $region14: #{tpu_custom_call.1} parent=11 // pred_check_branch
          %211 = sbr.rel (%p209) target = $region16
        $region15: #{tpu_custom_call.1} parent=11 // pred_region
          _
        $region16: #{tpu_custom_call.1} parent=11 // pred_fallthru
          _
        // Predicated region
        $region17: #{tpu_custom_call.1} parent=11 // pred_check
          %p212 = pneg %p84
        $region18: #{tpu_custom_call.1} parent=11 // pred_check_branch
          %214 = sbr.rel (%p212) target = $region20
        $region19: #{tpu_custom_call.1} parent=11 // pred_region
          _
        $region20: #{tpu_custom_call.1} parent=11 // pred_fallthru
          _
        // Predicated region
        $region21: #{tpu_custom_call.1} parent=11 // pred_check
          %p215 = pneg %p105
        $region22: #{tpu_custom_call.1} parent=11 // pred_check_branch
          %217 = sbr.rel (%p215) target = $region24
        $region23: #{tpu_custom_call.1} parent=11 // pred_region
          _
        $region24: #{tpu_custom_call.1} parent=11 // pred_fallthru
          _
        // Predicated region
        $region25: #{tpu_custom_call.1} parent=11 // pred_check
          %p218 = pneg %p126
        $region26: #{tpu_custom_call.1} parent=11 // pred_check_branch
          %220 = sbr.rel (%p218) target = $region28
        $region27: #{tpu_custom_call.1} parent=11 // pred_region
          _
        $region28: #{tpu_custom_call.1} parent=11 // pred_fallthru
          _
        // Predicated region
        $region29: #{tpu_custom_call.1} parent=11 // pred_check
          %p221 = pneg %p147
        $region30: #{tpu_custom_call.1} parent=11 // pred_check_branch
          %223 = sbr.rel (%p221) target = $region32
        $region31: #{tpu_custom_call.1} parent=11 // pred_region
          _
        $region32: #{tpu_custom_call.1} parent=11 // pred_fallthru
          _
        // Predicated region
        $region33: #{tpu_custom_call.1} parent=11 // pred_check
          %p224 = pneg %p168
        $region34: #{tpu_custom_call.1} parent=11 // pred_check_branch
          %226 = sbr.rel (%p224) target = $region36
        $region35: #{tpu_custom_call.1} parent=11 // pred_region
          _
        $region36: #{tpu_custom_call.1} parent=11 // pred_fallthru
          _
      $region12: #{tpu_custom_call.1} parent=5 // pred_fallthru
        _
      %p227 = scmp.lt.s32.totalorder %s16, 2
      // Predicated region
      $region37: #{tpu_custom_call.1} parent=5 // pred_check
        %p228 = pneg %p227
      $region38: #{tpu_custom_call.1} parent=5 // pred_check_branch
        %230 = sbr.rel (%p228) target = $region40
      $region39: #{tpu_custom_call.1} parent=5 // pred_region
        // Predicated region
        $region41: #{tpu_custom_call.1} parent=39 // pred_check
          %p231 = pneg %p36
        $region42: #{tpu_custom_call.1} parent=39 // pred_check_branch
          %233 = sbr.rel (%p231) target = $region44
        $region43: #{tpu_custom_call.1} parent=39 // pred_region
          %p234 = scmp.lt.s32.totalorder %s16, 1
          %s235 = scalar_select %p234, %s16, 1
          %s236 = smul.addr %s235, 4
          %s237 = smul.addr %s236, 4
          %s238 = scalar_lea.vmem %s0, %s237
        $region44: #{tpu_custom_call.1} parent=39 // pred_fallthru
          _
      $region40: #{tpu_custom_call.1} parent=5 // pred_fallthru
        _
      %p239 = scmp.le.s32.totalorder 1, %s16
      %p240 = scmp.lt.s32.totalorder %s16, 3
      %p241 = pnand %p239, %p240
      %p242 = pneg %p241
      // Predicated region
      $region45: #{tpu_custom_call.1} parent=5 // pred_check
        _
      $region46: #{tpu_custom_call.1} parent=5 // pred_check_branch
        %244 = sbr.rel (%p241) target = $region48
      $region47: #{tpu_custom_call.1} parent=5 // pred_region
        %s245 = ssub.s32 %s16, 1
        %p246 = scmp.lt.s32.totalorder %s21, 1
        %s247 = scalar_select %p246, %s21, 1
        %s248 = smul.addr %s247, 4
        %s249 = smul.addr %s248, 4
        %s250 = scalar_lea.vmem %s0, %s249
        %p251 = pneg %p42
        %p252 = pneg %p39
        %p253 = pneg %p63
        %p254 = pneg %p60
        %p255 = pneg %p84
        %p256 = pneg %p81
        %p257 = pneg %p105
        %p258 = pneg %p102
        %p259 = pneg %p126
        %p260 = pneg %p123
        %p261 = pneg %p147
        %p262 = pneg %p144
        %p263 = pneg %p168
        %p264 = pneg %p165
        %p265 = pneg %p194
        %p266 = pneg %p191
        %s267 = sand.u32 %s181, 1
        %s268 = scalar_lea.sflag [#allocation3], %s267
        %s269 = sand.u32 %s181, 1
        %s270 = smul.addr %s269, 16
        %s271 = scalar_lea.vmem [#allocation2], %s270
        %p272 = scmp.lt.s32.totalorder %s21, 1
        %s273 = scalar_select %p272, %s21, 1
        %s274 = smul.addr %s273, 4
        %s275 = smul.addr %s274, 4
        %s276 = scalar_lea.vmem %s0, %s275
        %v278 = vld [vmem:[%s276] sm:$0xff]
        %v279 = vld [vmem:[%s276 + $0x8] sm:$0xff]
        %v280 = vunpack.c.l.bf16 %v278
        %v281 = vunpack.c.h.bf16 %v278
        %v282 = vunpack.c.l.bf16 %v279
        %v283 = vunpack.c.h.bf16 %v279
        %v284 = vmax.f32 %v280, 0.0
        %v285 = vmax.f32 %v281, 0.0
        %v286 = vmax.f32 %v282, 0.0
        %v287 = vmax.f32 %v283, 0.0
        %v288 = vpack.c.bf16 %v285, %v284
        %v289 = vpack.c.bf16 %v287, %v286
        %v290 = vld [vmem:[%s1] sm:$0xf]
        %v291 = vld [vmem:[%s1 + $0x4] sm:$0xf]
        %v292 = vld [vmem:[%s1 + $0x8] sm:$0xf]
        %v293 = vld [vmem:[%s1 + $0xc] sm:$0xf]
        %v294 = vld [vmem:[%s1 + $0x10] sm:$0xf]
        %v295 = vld [vmem:[%s1 + $0x14] sm:$0xf]
        %v296 = vld [vmem:[%s1 + $0x18] sm:$0xf]
        %v297 = vld [vmem:[%s1 + $0x1c] sm:$0xf]
        %v298 = vld [vmem:[%s1 + $0x20] sm:$0xf]
        %v299 = vld [vmem:[%s1 + $0x24] sm:$0xf]
        %v300 = vld [vmem:[%s1 + $0x28] sm:$0xf]
        %v301 = vld [vmem:[%s1 + $0x2c] sm:$0xf]
        %v302 = vld [vmem:[%s1 + $0x30] sm:$0xf]
        %v303 = vld [vmem:[%s1 + $0x34] sm:$0xf]
        %v304 = vld [vmem:[%s1 + $0x38] sm:$0xf]
        %v305 = vld [vmem:[%s1 + $0x3c] sm:$0xf]
        %v306 = vld [vmem:[%s1 + $0x40] sm:$0xf]
        %v307 = vld [vmem:[%s1 + $0x44] sm:$0xf]
        %v308 = vld [vmem:[%s1 + $0x48] sm:$0xf]
        %v309 = vld [vmem:[%s1 + $0x4c] sm:$0xf]
        %v310 = vld [vmem:[%s1 + $0x50] sm:$0xf]
        %v311 = vld [vmem:[%s1 + $0x54] sm:$0xf]
        %v312 = vld [vmem:[%s1 + $0x58] sm:$0xf]
        %v313 = vld [vmem:[%s1 + $0x5c] sm:$0xf]
        %v314 = vld [vmem:[%s1 + $0x60] sm:$0xf]
        %v315 = vld [vmem:[%s1 + $0x64] sm:$0xf]
        %v316 = vld [vmem:[%s1 + $0x68] sm:$0xf]
        %v317 = vld [vmem:[%s1 + $0x6c] sm:$0xf]
        %v318 = vld [vmem:[%s1 + $0x70] sm:$0xf]
        %v319 = vld [vmem:[%s1 + $0x74] sm:$0xf]
        %v320 = vld [vmem:[%s1 + $0x78] sm:$0xf]
        %v321 = vld [vmem:[%s1 + $0x7c] sm:$0xf]
        %v322 = vld [vmem:[%s2] sm:$0x1]
        %v324 = vperm.slane %v322, 0
        %v328 = vunpack.c.l.b16 %v288
        %v329 = vunpack.c.h.b16 %v288
        %v330 = vunpack.c.l.b16 %v289
        %v331 = vunpack.c.h.b16 %v289
        %v332 = vpack.c.b16 %v330, %v328
        %v333 = vpack.c.b16 %v331, %v329
        %v368 = vunpack.c.l.b16 %v290
        %v369 = vunpack.c.l.b16 %v291
        %v370 = vunpack.c.l.b16 %v292
        %v371 = vunpack.c.l.b16 %v293
        %v372 = vunpack.c.l.b16 %v294
        %v373 = vunpack.c.l.b16 %v295
        %v374 = vunpack.c.l.b16 %v296
        %v375 = vunpack.c.l.b16 %v297
        %v376 = vunpack.c.l.b16 %v298
        %v377 = vunpack.c.l.b16 %v299
        %v378 = vunpack.c.l.b16 %v300
        %v379 = vunpack.c.l.b16 %v301
        %v380 = vunpack.c.l.b16 %v302
        %v381 = vunpack.c.l.b16 %v303
        %v382 = vunpack.c.l.b16 %v304
        %v383 = vunpack.c.l.b16 %v305
        %v384 = vunpack.c.l.b16 %v306
        %v385 = vunpack.c.l.b16 %v307
        %v386 = vunpack.c.l.b16 %v308
        %v387 = vunpack.c.l.b16 %v309
        %v388 = vunpack.c.l.b16 %v310
        %v389 = vunpack.c.l.b16 %v311
        %v390 = vunpack.c.l.b16 %v312
        %v391 = vunpack.c.l.b16 %v313
        %v392 = vunpack.c.l.b16 %v314
        %v393 = vunpack.c.l.b16 %v315
        %v394 = vunpack.c.l.b16 %v316
        %v395 = vunpack.c.l.b16 %v317
        %v396 = vunpack.c.l.b16 %v318
        %v397 = vunpack.c.l.b16 %v319
        %v398 = vunpack.c.l.b16 %v320
        %v399 = vunpack.c.l.b16 %v321
        %v400 = vpack.c.b16 %v369, %v368
        %v401 = vpack.c.b16 %v371, %v370
        %v402 = vpack.c.b16 %v373, %v372
        %v403 = vpack.c.b16 %v375, %v374
        %v404 = vpack.c.b16 %v377, %v376
        %v405 = vpack.c.b16 %v379, %v378
        %v406 = vpack.c.b16 %v381, %v380
        %v407 = vpack.c.b16 %v383, %v382
        %v408 = vpack.c.b16 %v385, %v384
        %v409 = vpack.c.b16 %v387, %v386
        %v410 = vpack.c.b16 %v389, %v388
        %v411 = vpack.c.b16 %v391, %v390
        %v412 = vpack.c.b16 %v393, %v392
        %v413 = vpack.c.b16 %v395, %v394
        %v414 = vpack.c.b16 %v397, %v396
        %v415 = vpack.c.b16 %v399, %v398
        %432 = vmatpush.bf16.msra.mxu0 %v407
        %433 = vmatpush.bf16.msra.mxu0 %v406
        %434 = vmatpush.bf16.msra.mxu0 %v405
        %435 = vmatpush.bf16.msra.mxu0 %v404
        %436 = vmatpush.bf16.msra.mxu0 %v403
        %437 = vmatpush.bf16.msra.mxu0 %v402
        %438 = vmatpush.bf16.msra.mxu0 %v401
        %439 = vmatpush.bf16.msra.mxu0 %v400
        %440 = vmatmul.bf16.gmra.mxu0 %v332
        %v441 = vpop.f32.mrf.mxu0
        %v442 = vadd.f32 %v324, %v441
        %v443 = vpop.f32.mrf.mxu0
        %v444 = vadd.f32 %v324, %v443
        %445 = vdwg.mxu0
        %446 = vmatpush.bf16.msra.mxu0 %v415
        %447 = vmatpush.bf16.msra.mxu0 %v414
        %448 = vmatpush.bf16.msra.mxu0 %v413
        %449 = vmatpush.bf16.msra.mxu0 %v412
        %450 = vmatpush.bf16.msra.mxu0 %v411
        %451 = vmatpush.bf16.msra.mxu0 %v410
        %452 = vmatpush.bf16.msra.mxu0 %v409
        %453 = vmatpush.bf16.msra.mxu0 %v408
        %454 = vmatmul.bf16.gmra.mxu0 %v333
        %v455 = vpop.f32.mrf.mxu0
        %v456 = vadd.f32 %v442, %v455
        %v457 = vpop.f32.mrf.mxu0
        %v458 = vadd.f32 %v444, %v457
        %459 = vdwg.mxu0
        %v460 = vmax.f32 %v456, 0.0
        %v461 = vmax.f32 %v458, 0.0
        %vm462 = vcmask 1048064
        %463 = vrot.lane.b32.xlu0 %v460, 64
        %v464 = vpop.permute.xlu0 %463
        %v465 = vsel %vm462, %v464, %v460
        %466 = vrot.lane.b32.xlu0 %v461, 64
        %v467 = vpop.permute.xlu0 %466
        %v468 = vsel %vm462, %v467, %v461
        %469 = vrot.lane.b32.xlu0 %v465, 64
        %v470 = vpop.permute.xlu0 %469
        %471 = vrot.lane.b32.xlu0 %v468, 64
        %v472 = vpop.permute.xlu0 %471
        %v473 = vsel %vm462, %v470, %v460
        %v474 = vsel %vm462, %v472, %v461
        %v475 = vld [vmem:[%s3] sm:$0x1]
        %v477 = vperm.slane %v475, 0
        %478 = vrot.lane.b32.xlu0 %v477, 60
        %v479 = vpop.permute.xlu0 %478
        %v481 = vmul.f32 %v473, %v479
        %v482 = vmul.f32 %v474, %v479
        %s483 = scalar_lea.vmem %s3, 1
        %v484 = vld [vmem:[%s483] sm:$0x1]
        %v486 = vperm.slane %v484, 0
        %v488 = vmul.f32 %v460, %v486
        %v489 = vmul.f32 %v461, %v486
        %492 = vrot.lane.b32.xlu0 %v488, 60
        %v493 = vpop.permute.xlu0 %492
        %494 = vrot.lane.b32.xlu0 %v489, 60
        %v495 = vpop.permute.xlu0 %494
        %v498 = vadd.f32 %v481, %v493
        %v499 = vadd.f32 %v482, %v495
        %s500 = scalar_lea.vmem %s3, 2
        %v501 = vld [vmem:[%s500] sm:$0x1]
        %v503 = vperm.slane %v501, 0
        %504 = vrot.lane.b32.xlu0 %v503, 4
        %v505 = vpop.permute.xlu0 %504
        %v507 = vmul.f32 %v473, %v505
        %v508 = vmul.f32 %v474, %v505
        %511 = vrot.lane.b32.xlu0 %v507, 56
        %v512 = vpop.permute.xlu0 %511
        %513 = vrot.lane.b32.xlu0 %v508, 56
        %v514 = vpop.permute.xlu0 %513
        %v517 = vadd.f32 %v498, %v512
        %v518 = vadd.f32 %v499, %v514
        %s519 = scalar_lea.vmem %s3, 3
        %v520 = vld [vmem:[%s519] sm:$0x1]
        %v522 = vperm.slane %v520, 0
        %523 = vrot.lane.b32.xlu0 %v522, 60
        %v524 = vpop.permute.xlu0 %523
        %v526 = vmul.f32 %v473, %v524
        %v527 = vmul.f32 %v474, %v524
        %s528 = scalar_lea.vmem %s3, 4
        %v529 = vld [vmem:[%s528] sm:$0x1]
        %v531 = vperm.slane %v529, 0
        %v533 = vmul.f32 %v460, %v531
        %v534 = vmul.f32 %v461, %v531
        %537 = vrot.lane.b32.xlu0 %v533, 60
        %v538 = vpop.permute.xlu0 %537
        %539 = vrot.lane.b32.xlu0 %v534, 60
        %v540 = vpop.permute.xlu0 %539
        %v543 = vadd.f32 %v526, %v538
        %v544 = vadd.f32 %v527, %v540
        %s545 = scalar_lea.vmem %s3, 5
        %v546 = vld [vmem:[%s545] sm:$0x1]
        %v548 = vperm.slane %v546, 0
        %549 = vrot.lane.b32.xlu0 %v548, 4
        %v550 = vpop.permute.xlu0 %549
        %v552 = vmul.f32 %v473, %v550
        %v553 = vmul.f32 %v474, %v550
        %556 = vrot.lane.b32.xlu0 %v552, 56
        %v557 = vpop.permute.xlu0 %556
        %558 = vrot.lane.b32.xlu0 %v553, 56
        %v559 = vpop.permute.xlu0 %558
        %v562 = vadd.f32 %v543, %v557
        %v563 = vadd.f32 %v544, %v559
        %s564 = scalar_lea.vmem %s3, 6
        %v565 = vld [vmem:[%s564] sm:$0x1]
        %v567 = vperm.slane %v565, 0
        %568 = vrot.lane.b32.xlu0 %v567, 60
        %v569 = vpop.permute.xlu0 %568
        %v571 = vmul.f32 %v473, %v569
        %v572 = vmul.f32 %v474, %v569
        %s573 = scalar_lea.vmem %s3, 7
        %v574 = vld [vmem:[%s573] sm:$0x1]
        %v576 = vperm.slane %v574, 0
        %v578 = vmul.f32 %v460, %v576
        %v579 = vmul.f32 %v461, %v576
        %582 = vrot.lane.b32.xlu0 %v578, 60
        %v583 = vpop.permute.xlu0 %582
        %584 = vrot.lane.b32.xlu0 %v579, 60
        %v585 = vpop.permute.xlu0 %584
        %v588 = vadd.f32 %v571, %v583
        %v589 = vadd.f32 %v572, %v585
        %s590 = scalar_lea.vmem %s3, 8
        %v591 = vld [vmem:[%s590] sm:$0x1]
        %v593 = vperm.slane %v591, 0
        %594 = vrot.lane.b32.xlu0 %v593, 4
        %v595 = vpop.permute.xlu0 %594
        %v597 = vmul.f32 %v473, %v595
        %v598 = vmul.f32 %v474, %v595
        %601 = vrot.lane.b32.xlu0 %v597, 56
        %v602 = vpop.permute.xlu0 %601
        %603 = vrot.lane.b32.xlu0 %v598, 56
        %v604 = vpop.permute.xlu0 %603
        %v607 = vadd.f32 %v588, %v602
        %v608 = vadd.f32 %v589, %v604
        %vm611 = vcmask 1040384
        %v612 = vrot.slane %v517, 7
        %v613 = vrot.slane %v518, 7
        %v614 = vsel %vm611, %v612, %v613
        %615 = vrot.lane.b32.xlu0 %v612, 68
        %v616 = vpop.permute.xlu0 %615
        %617 = vrot.lane.b32.xlu0 %v614, 68
        %v618 = vpop.permute.xlu0 %617
        %v620 = vsel %vm611, 0.0, %v616
        %vm623 = vcmask 1046528
        %v624 = vrot.slane %v607, 1
        %v625 = vrot.slane %v608, 1
        %v626 = vsel %vm623, %v624, %v625
        %v629 = vsel %vm623, %v625, 0.0
        %631 = vrot.lane.b32.xlu0 %v620, 60
        %v632 = vpop.permute.xlu0 %631
        %633 = vrot.lane.b32.xlu0 %v618, 60
        %v634 = vpop.permute.xlu0 %633
        %v637 = vadd.f32 %v562, %v632
        %v638 = vadd.f32 %v563, %v634
        %v639 = vadd.f32 %v637, %v626
        %v640 = vadd.f32 %v638, %v629
        %v641 = vld [vmem:[%s4] sm:$0x1]
        %v643 = vperm.slane %v641, 0
        %644 = vrot.lane.b32.xlu0 %v643, 60
        %v645 = vpop.permute.xlu0 %644
        %v647 = vadd.f32 %v639, %v645
        %v648 = vadd.f32 %v640, %v645
        %v649 = vmax.f32 %v647, 0.0
        %v650 = vmax.f32 %v648, 0.0
        %v651 = vpack.c.bf16 %v650, %v649
        %v652 = vld [vmem:[%s5] sm:$0xff]
        %v653 = vld [vmem:[%s5 + $0x8] sm:$0xff]
        %v654 = vld [vmem:[%s5 + $0x10] sm:$0xff]
        %v655 = vld [vmem:[%s5 + $0x18] sm:$0xff]
        %v656 = vld [vmem:[%s5 + $0x20] sm:$0xff]
        %v657 = vld [vmem:[%s5 + $0x28] sm:$0xff]
        %v658 = vld [vmem:[%s5 + $0x30] sm:$0xff]
        %v659 = vld [vmem:[%s5 + $0x38] sm:$0xff]
        %v660 = vld [vmem:[%s6] sm:$0x3]
        %v662 = vperm.slane %v660, 0
        %v663 = vperm.slane %v660, 1
        %667 = vrot.lane.b32.xlu0 %v651, 68
        %v668 = vpop.permute.xlu0 %667
        %v677 = vunpack.c.l.b16 %v652
        %v678 = vunpack.c.h.b16 %v652
        %v679 = vunpack.c.l.b16 %v653
        %v680 = vunpack.c.h.b16 %v653
        %v681 = vunpack.c.l.b16 %v654
        %v682 = vunpack.c.h.b16 %v654
        %v683 = vunpack.c.l.b16 %v655
        %v684 = vunpack.c.h.b16 %v655
        %v685 = vunpack.c.l.b16 %v656
        %v686 = vunpack.c.h.b16 %v656
        %v687 = vunpack.c.l.b16 %v657
        %v688 = vunpack.c.h.b16 %v657
        %v689 = vunpack.c.l.b16 %v658
        %v690 = vunpack.c.h.b16 %v658
        %v691 = vunpack.c.l.b16 %v659
        %v692 = vunpack.c.h.b16 %v659
        %v693 = vpack.c.b16 %v679, %v677
        %v694 = vpack.c.b16 %v680, %v678
        %v695 = vpack.c.b16 %v683, %v681
        %v696 = vpack.c.b16 %v684, %v682
        %v697 = vpack.c.b16 %v687, %v685
        %v698 = vpack.c.b16 %v688, %v686
        %v699 = vpack.c.b16 %v691, %v689
        %v700 = vpack.c.b16 %v692, %v690
        %vm709 = vcmask 523264
        %v711 = vsel %vm709, %v668, 0
        %713 = vmatpush.bf16.msra.mxu0 0
        %714 = vmatpush.bf16.msra.mxu0 0
        %715 = vmatpush.bf16.msra.mxu0 0
        %716 = vmatpush.bf16.msra.mxu0 0
        %717 = vmatpush.bf16.msra.mxu0 %v699
        %718 = vmatpush.bf16.msra.mxu0 %v697
        %719 = vmatpush.bf16.msra.mxu0 %v695
        %720 = vmatpush.bf16.msra.mxu0 %v693
        %721 = vmatmul.bf16.gmra.mxu0 %v711
        %v722 = vpop.f32.mrf.mxu0
        %v723 = vadd.f32 %v662, %v722
        %v724 = vpop.f32.mrf.mxu0
        %v725 = vadd.f32 %v662, %v724
        %726 = vdwg.mxu0
        %727 = vmatpush.bf16.msra.mxu0 0
        %728 = vmatpush.bf16.msra.mxu0 0
        %729 = vmatpush.bf16.msra.mxu0 0
        %730 = vmatpush.bf16.msra.mxu0 0
        %731 = vmatpush.bf16.msra.mxu0 %v700
        %732 = vmatpush.bf16.msra.mxu0 %v698
        %733 = vmatpush.bf16.msra.mxu0 %v696
        %734 = vmatpush.bf16.msra.mxu0 %v694
        %735 = vmatmul.bf16.gmra.mxu0 %v711
        %v736 = vpop.f32.mrf.mxu0
        %v737 = vadd.f32 %v663, %v736
        %v738 = vpop.f32.mrf.mxu0
        %v739 = vadd.f32 %v663, %v738
        %740 = vdwg.mxu0
        %v741 = vunpack.c.l.bf16 %v288
        %v742 = vunpack.c.h.bf16 %v288
        %v743 = vunpack.c.l.bf16 %v289
        %v744 = vunpack.c.h.bf16 %v289
        %v745 = vadd.f32 %v723, %v741
        %v746 = vadd.f32 %v737, %v742
        %v747 = vadd.f32 %v725, %v743
        %v748 = vadd.f32 %v739, %v744
        %v749 = vpack.c.bf16 %v746, %v745
        %v750 = vpack.c.bf16 %v748, %v747
        %751 = vst [vmem:[%s271] sm:$0xff] %v749
        %752 = vst [vmem:[%s271 + $0x8] sm:$0xff] %v750
        %s753 = sand.u32 %s181, 1
        %s754 = scalar_lea.sflag [#allocation3], %s753
        %s755 = sand.u32 %s181, 1
        %s756 = smul.addr %s755, 16
        %s757 = scalar_lea.vmem [#allocation2], %s756
        // Predicated region
        $region49: #{tpu_custom_call.1} parent=47 // pred_check
          %p758 = pneg %p191
        $region50: #{tpu_custom_call.1} parent=47 // pred_check_branch
          %760 = sbr.rel (%p758) target = $region52
        $region51: #{tpu_custom_call.1} parent=47 // pred_region
          %762 = vsyncadd %s754, 0
          %s763 = smul.addr %s21, 4
          %s764 = smul.addr %s763, 4
          %s765 = scalar_lea.hbm %s7, %s764
          %s766 = sshll.u32 %s757, 4
          %s767 = int_to_ptr.vmem [resolvable:$true] %s766
          %s768 = sshll.u32 %s765, 4
          %s769 = int_to_ptr.hbm [resolvable:$true] %s768
          %774 = dma.vmem_to_hbm [thread:$0]  %s767, 256, %s769, %s754, 128, 128, 8
        $region52: #{tpu_custom_call.1} parent=47 // pred_fallthru
          _
      $region48: #{tpu_custom_call.1} parent=5 // pred_fallthru
        _
      %p775 = scmp.le.s32.totalorder 2, %s16
      // Predicated region
      $region53: #{tpu_custom_call.1} parent=5 // pred_check
        %p776 = pneg %p775
      $region54: #{tpu_custom_call.1} parent=5 // pred_check_branch
        %778 = sbr.rel (%p776) target = $region56
      $region55: #{tpu_custom_call.1} parent=5 // pred_region
        %s779 = ssub.s32 %s16, 2
        // Predicated region
        $region57: #{tpu_custom_call.1} parent=55 // pred_check
          %p780 = pneg %p197
        $region58: #{tpu_custom_call.1} parent=55 // pred_check_branch
          %782 = sbr.rel (%p780) target = $region60
        $region59: #{tpu_custom_call.1} parent=55 // pred_region
          %s783 = sand.u32 %s182, 1
          %s784 = scalar_lea.sflag [#allocation3], %s783
          %s785 = sand.u32 %s182, 1
          %s786 = smul.addr %s785, 16
          %s787 = scalar_lea.vmem [#allocation2], %s786
          %789 = dma.done %s784, 256
        $region60: #{tpu_custom_call.1} parent=55 // pred_fallthru
          _
      $region56: #{tpu_custom_call.1} parent=5 // pred_fallthru
        _
    $region6: #{tpu_custom_call.1} parent=1 // loop_footer
      %s20 = sadd.s32 1, %s16
    $region7: #{tpu_custom_call.1} parent=1 // loop_footer_branch
      %15 = sbr.rel target = $region3
    $region8: #{tpu_custom_call.1} parent=1 // loop_exit
      _
    %790 = vsyncpa [#allocation3], 1
    %s791 = scalar_lea.sflag [#allocation3], 1
    %792 = vsyncpa %s791, 1

</llo_original>
